<compile_context>
chip_gen: v5e
topology: v5e:2x2
jax: 0.10.0
libtpu: 0.0.40
codegen_flags: <defaults>
</compile_context>

<pallas_src>
import functools

import jax
import jax.numpy as jnp
from jax.experimental import pallas as pl
from jax.experimental.pallas import tpu as pltpu


def _round_up(x, m):
    return (x + m - 1) // m * m


def _make_mlp_kernel(sub_m, n_sub):
    """Kernel over one (tm, d_in) x-tile; tm = sub_m * n_sub (static ints)."""

    def kernel(x_ref, w1_ref, b1_ref, w2_ref, b2_ref, w3_ref, b3_ref, o_ref):
        # Weights / biases are grid-invariant (VMEM-resident); load once per tile.
        # .astype(bf16) is a no-op when params were pre-converted by prepare_params.
        w1 = w1_ref[...].astype(jnp.bfloat16)
        w2 = w2_ref[...].astype(jnp.bfloat16)
        w3 = w3_ref[...].astype(jnp.bfloat16)
        b1 = b1_ref[...]
        b2 = b2_ref[...]
        b3 = b3_ref[...]

        # Sub-tile the batch rows so per-chunk f32 intermediates (sub_m x d_h) stay
        # within the 64-vreg register file instead of spilling to VMEM.
        for c in range(n_sub):                      # n_sub is a small static int
            lo, hi = c * sub_m, (c + 1) * sub_m
            x = x_ref[lo:hi, :].astype(jnp.bfloat16)   # in-kernel cast: x arrives f32

            h = jnp.dot(x, w1, preferred_element_type=jnp.float32)
            h = jnp.maximum(h + b1, 0.0)             # ReLU, f32 on the VPU

            h = jnp.dot(h.astype(jnp.bfloat16), w2, preferred_element_type=jnp.float32)
            h = jnp.maximum(h + b2, 0.0)

            y = jnp.dot(h.astype(jnp.bfloat16), w3, preferred_element_type=jnp.float32)
            o_ref[lo:hi, :] = (y + b3).astype(o_ref.dtype)   # true-width (sub_m, d_out)

    return kernel


def prepare_params(w1, b1, w2, b2, w3, b3):
    """One-time parameter conversion (call OUTSIDE the per-step path):
    bf16 MXU-operand weights, f32 biases. Keeps the arithmetic contract stable and
    avoids re-quantizing / re-writing the weights in HBM on every forward call."""
    bf = jnp.bfloat16
    return (w1.astype(bf), b1.astype(jnp.float32),
            w2.astype(bf), b2.astype(jnp.float32),
            w3.astype(bf), b3.astype(jnp.float32))


@functools.partial(jax.jit, static_argnames=("block_rows",))
def mlp_forward(x, w1, b1, w2, b2, w3, b3, *, block_rows=256):
    """Fused 3-layer MLP forward. x: (B, D_in) f32 -> (B, D_out) f32."""
    B, d_in = x.shape
    d_h = w1.shape[1]
    d_out = w3.shape[1]

    # Biases as (1, D) rows -> clean (sublane, lane) layout. reshape is metadata-only.
    b1_2d = b1.reshape(1, d_h)
    b2_2d = b2.reshape(1, d_h)
    b3_2d = b3.reshape(1, d_out)

    # ---- batch tiling: 16-aligned rows, <=128-row sub-tiles inside the kernel ----
    b16 = _round_up(B, 16)
    sub_m = b16 if b16 <= 128 else 128
    bt = _round_up(b16, sub_m)
    tm = min(_round_up(block_rows, sub_m), bt)
    # v7x: keep >= 2 grid tiles when there is enough work, so the "parallel" axis can
    # be sharded across both TensorCores (skip for toy batches: ~0.35us/step overhead).
    if b16 >= 256 and bt // tm < 2:
        tm = _round_up(pl.cdiv(bt, 2), sub_m)
    b_pad = _round_up(bt, tm)
    n_sub = tm // sub_m
    num_tiles = b_pad // tm

    x_p = x if b_pad == B else jnp.pad(x, ((0, b_pad - B), (0, 0)))

    kernel = _make_mlp_kernel(sub_m, n_sub)

    # Grid-invariant weights/biases: single-buffer them (halves resident-weight VMEM;
    # matters on v7x's 64 MiB VMEM once hidden_dim scales up).
    def resident_spec(shape):
        return pl.BlockSpec(shape, lambda i: (0, 0), pipeline_mode=pl.Buffered(1))

    # ---- advisory cost estimate (true d_out, no padded lanes) ----
    cost = pl.CostEstimate(
        flops=2 * b_pad * (d_in * d_h + d_h * d_h + d_h * d_out),
        transcendentals=0,
        bytes_accessed=(b_pad * d_in * 4                              # x (f32)
                        + (d_in * d_h + d_h * d_h + d_h * d_out) * 2  # bf16 weights
                        + (2 * d_h + d_out) * 4                       # biases
                        + b_pad * d_out * 4),                         # output (f32)
    )

    # ---- right-sized VMEM limit (only set when the working set needs it) ----
    def tile_bytes(rows, cols, itemsize, bufs):
        return _round_up(rows, 8) * _round_up(cols, 128) * itemsize * bufs

    vmem_needed = (tile_bytes(tm, d_in, 4, 2)        # x tile, double-buffered
                   + tile_bytes(tm, d_out, 4, 2)     # out tile, double-buffered
                   + tile_bytes(d_in, d_h, 2, 1)     # w1 (single-buffered)
                   + tile_bytes(d_h, d_h, 2, 1)      # w2
                   + tile_bytes(d_h, d_out, 2, 1)    # w3
                   + 3 * tile_bytes(1, d_h, 4, 1)    # biases (generous)
                   + (1 << 20))                      # compiler scratch slack
    vmem_limit = int(vmem_needed * 1.25) if vmem_needed > (24 << 20) else None

    out = pl.pallas_call(
        kernel,
        out_shape=jax.ShapeDtypeStruct((b_pad, d_out), jnp.float32),
        grid=(num_tiles,),
        in_specs=[
            pl.BlockSpec((tm, d_in), lambda i: (i, 0)),   # x tile (f32, pipelined)
            resident_spec((d_in, d_h)),                   # w1 (bf16, resident)
            resident_spec((1, d_h)),                      # b1
            resident_spec((d_h, d_h)),                    # w2
            resident_spec((1, d_h)),                      # b2
            resident_spec((d_h, d_out)),                  # w3 (true width, no K/N pad)
            resident_spec((1, d_out)),                    # b3
        ],
        out_specs=pl.BlockSpec((tm, d_out), lambda i: (i, 0)),
        compiler_params=pltpu.CompilerParams(
            dimension_semantics=("parallel",),
            vmem_limit_bytes=vmem_limit,
        ),
        cost_estimate=cost,
    )(x_p, w1, b1_2d, w2, b2_2d, w3, b3_2d)

    return out[:B, :]       # strip batch padding; output lanes are already true width


def init_params(key, input_dim, hidden_dim, output_dim):
    """Deterministic synthetic parameters (nn.Linear-like init, stored as (in, out))."""
    ks = jax.random.split(key, 6)

    def linear(kw, kb, fan_in, fan_out):
        bound = 1.0 / jnp.sqrt(fan_in)
        w = jax.random.uniform(kw, (fan_in, fan_out), jnp.float32, -bound, bound)
        b = jax.random.uniform(kb, (fan_out,), jnp.float32, -bound, bound)
        return w, b

    w1, b1 = linear(ks[0], ks[1], input_dim, hidden_dim)
    w2, b2 = linear(ks[2], ks[3], hidden_dim, hidden_dim)
    w3, b3 = linear(ks[4], ks[5], hidden_dim, output_dim)
    return w1, b1, w2, b2, w3, b3


def mlp_reference_f32(x, w1, b1, w2, b2, w3, b3):
    h = jnp.maximum(x @ w1 + b1, 0.0)
    h = jnp.maximum(h @ w2 + b2, 0.0)
    return h @ w3 + b3


def mlp_reference_bf16(x, w1, b1, w2, b2, w3, b3):
    # Mirrors the kernel's bf16-operand / f32-accumulate arithmetic exactly.
    bf = jnp.bfloat16
    h = jnp.dot(x.astype(bf), w1.astype(bf), preferred_element_type=jnp.float32) + b1
    h = jnp.maximum(h, 0.0)
    h = jnp.dot(h.astype(bf), w2.astype(bf), preferred_element_type=jnp.float32) + b2
    h = jnp.maximum(h, 0.0)
    return jnp.dot(h.astype(bf), w3.astype(bf), preferred_element_type=jnp.float32) + b3


if __name__ == "__main__":
    key = jax.random.PRNGKey(0)
    k_x, k_p = jax.random.split(key)

    # Small shapes consistent with the module: batch=32, input_dim=16,
    # hidden_dim=128 (config "128h"), output_dim=4.
    B, D_IN, D_H, D_OUT = 32, 16, 128, 4

    x = jax.random.normal(k_x, (B, D_IN), jnp.float32)
    raw_params = init_params(k_p, D_IN, D_H, D_OUT)

    # One-time param conversion (bf16 weights) -- deliberately outside the hot path.
    params = prepare_params(*raw_params)

    out = mlp_forward(x, *params)
    out = jax.block_until_ready(out)
    assert out.shape == (B, D_OUT)

    # Tight check against a reference that uses the same bf16-operand arithmetic.
    ref_bf16 = mlp_reference_bf16(x, *raw_params)
    assert jnp.allclose(out, ref_bf16, atol=1e-3, rtol=1e-3), "mismatch vs. bf16 reference"

    # Loose sanity check against the pure-f32 reference (bf16 rounding tolerance).
    ref_f32 = mlp_reference_f32(x, *raw_params)
    assert jnp.allclose(out, ref_f32, atol=5e-2, rtol=5e-2), "mismatch vs. f32 reference"

    print("KERNEL_OK")
</pallas_src>

<mosaic_0001>
module attributes {stable_mosaic.version = 11 : i64} {
  func.func @kernel(%arg0: i32, %arg1: memref<32x16xf32, #tpu.memory_space<vmem>>, %arg2: memref<16x128xbf16, #tpu.memory_space<vmem>>, %arg3: memref<1x128xf32, #tpu.memory_space<vmem>>, %arg4: memref<128x128xbf16, #tpu.memory_space<vmem>>, %arg5: memref<1x128xf32, #tpu.memory_space<vmem>>, %arg6: memref<128x4xbf16, #tpu.memory_space<vmem>>, %arg7: memref<1x4xf32, #tpu.memory_space<vmem>>, %arg8: memref<32x4xf32, #tpu.memory_space<vmem>>) attributes {dimension_semantics = [#tpu.dimension_semantics<parallel>], iteration_bounds = array<i64: 1>, scalar_prefetch = 0 : i64, scratch_operands = 0 : i64, tpu.core_type = #tpu.core_type<tc>, window_params = [{transform_indices = @transform_0, window_bounds = array<i64: 32, 16>}, {pipeline_mode = #tpu.pipeline_mode<synchronous>, transform_indices = @transform_1, window_bounds = array<i64: 16, 128>}, {pipeline_mode = #tpu.pipeline_mode<synchronous>, transform_indices = @transform_2, window_bounds = array<i64: 1, 128>}, {pipeline_mode = #tpu.pipeline_mode<synchronous>, transform_indices = @transform_3, window_bounds = array<i64: 128, 128>}, {pipeline_mode = #tpu.pipeline_mode<synchronous>, transform_indices = @transform_4, window_bounds = array<i64: 1, 128>}, {pipeline_mode = #tpu.pipeline_mode<synchronous>, transform_indices = @transform_5, window_bounds = array<i64: 128, 4>}, {pipeline_mode = #tpu.pipeline_mode<synchronous>, transform_indices = @transform_6, window_bounds = array<i64: 1, 4>}, {transform_indices = @transform_7, window_bounds = array<i64: 32, 4>}]} {
    %c0 = arith.constant 0 : index
    %c0_0 = arith.constant 0 : index
    %0 = vector.load %arg2[%c0, %c0_0] : memref<16x128xbf16, #tpu.memory_space<vmem>>, vector<16x128xbf16>
    %c0_1 = arith.constant 0 : index
    %c0_2 = arith.constant 0 : index
    %1 = vector.load %arg4[%c0_1, %c0_2] : memref<128x128xbf16, #tpu.memory_space<vmem>>, vector<128x128xbf16>
    %c0_3 = arith.constant 0 : index
    %c0_4 = arith.constant 0 : index
    %2 = vector.load %arg6[%c0_3, %c0_4] : memref<128x4xbf16, #tpu.memory_space<vmem>>, vector<128x4xbf16>
    %c0_5 = arith.constant 0 : index
    %c0_6 = arith.constant 0 : index
    %3 = vector.load %arg3[%c0_5, %c0_6] : memref<1x128xf32, #tpu.memory_space<vmem>>, vector<1x128xf32>
    %c0_7 = arith.constant 0 : index
    %c0_8 = arith.constant 0 : index
    %4 = vector.load %arg5[%c0_7, %c0_8] : memref<1x128xf32, #tpu.memory_space<vmem>>, vector<1x128xf32>
    %c0_9 = arith.constant 0 : index
    %c0_10 = arith.constant 0 : index
    %5 = vector.load %arg7[%c0_9, %c0_10] : memref<1x4xf32, #tpu.memory_space<vmem>>, vector<1x4xf32>
    %c0_11 = arith.constant 0 : index
    %c0_12 = arith.constant 0 : index
    %6 = vector.load %arg1[%c0_11, %c0_12] : memref<32x16xf32, #tpu.memory_space<vmem>>, vector<32x16xf32>
    %7 = arith.truncf %6 : vector<32x16xf32> to vector<32x16xbf16>
    %cst = arith.constant dense<0.000000e+00> : vector<32x128xf32>
    %8 = tpu.matmul %7, %0, %cst {dimension_numbers = #tpu.dot_dimension_numbers<[1], [0], [0], [1], [0, 0, 1, 1], [], []>} : vector<32x16xbf16>, vector<16x128xbf16>, vector<32x128xf32> -> vector<32x128xf32>
    %9 = vector.broadcast %3 : vector<1x128xf32> to vector<32x128xf32>
    %10 = arith.addf %8, %9 : vector<32x128xf32>
    %cst_13 = arith.constant 0.000000e+00 : f32
    %11 = vector.broadcast %cst_13 : f32 to vector<32x128xf32>
    %12 = arith.maximumf %10, %11 : vector<32x128xf32>
    %13 = arith.truncf %12 : vector<32x128xf32> to vector<32x128xbf16>
    %cst_14 = arith.constant dense<0.000000e+00> : vector<32x128xf32>
    %14 = tpu.matmul %13, %1, %cst_14 {dimension_numbers = #tpu.dot_dimension_numbers<[1], [0], [0], [1], [0, 0, 1, 1], [], []>} : vector<32x128xbf16>, vector<128x128xbf16>, vector<32x128xf32> -> vector<32x128xf32>
    %15 = vector.broadcast %4 : vector<1x128xf32> to vector<32x128xf32>
    %16 = arith.addf %14, %15 : vector<32x128xf32>
    %cst_15 = arith.constant 0.000000e+00 : f32
    %17 = vector.broadcast %cst_15 : f32 to vector<32x128xf32>
    %18 = arith.maximumf %16, %17 : vector<32x128xf32>
    %19 = arith.truncf %18 : vector<32x128xf32> to vector<32x128xbf16>
    %cst_16 = arith.constant dense<0.000000e+00> : vector<32x4xf32>
    %20 = tpu.matmul %19, %2, %cst_16 {dimension_numbers = #tpu.dot_dimension_numbers<[1], [0], [0], [1], [0, 0, 1, 1], [], []>} : vector<32x128xbf16>, vector<128x4xbf16>, vector<32x4xf32> -> vector<32x4xf32>
    %21 = vector.broadcast %5 : vector<1x4xf32> to vector<32x4xf32>
    %22 = arith.addf %20, %21 : vector<32x4xf32>
    %c0_17 = arith.constant 0 : index
    %c0_18 = arith.constant 0 : index
    %23 = vector.load %arg8[%c0_17, %c0_18] : memref<32x4xf32, #tpu.memory_space<vmem>>, vector<32x4xf32>
    tpu.vector_store %arg8[%c0_17, %c0_18], %22 {strides = array<i32>} : memref<32x4xf32, #tpu.memory_space<vmem>>, vector<32x4xf32>,
    return
  }
  func.func @transform_0(%arg0: i32) -> (i32, i32) {
    %c0_i32 = arith.constant 0 : i32
    %c0_i32_0 = arith.constant 0 : i32
    return %arg0, %c0_i32 : i32, i32
  }
  func.func @transform_1(%arg0: i32) -> (i32, i32) {
    %c0_i32 = arith.constant 0 : i32
    %c0_i32_0 = arith.constant 0 : i32
    %c0_i32_1 = arith.constant 0 : i32
    return %c0_i32, %c0_i32_0 : i32, i32
  }
  func.func @transform_2(%arg0: i32) -> (i32, i32) {
    %c0_i32 = arith.constant 0 : i32
    %c0_i32_0 = arith.constant 0 : i32
    %c0_i32_1 = arith.constant 0 : i32
    return %c0_i32, %c0_i32_0 : i32, i32
  }
  func.func @transform_3(%arg0: i32) -> (i32, i32) {
    %c0_i32 = arith.constant 0 : i32
    %c0_i32_0 = arith.constant 0 : i32
    %c0_i32_1 = arith.constant 0 : i32
    return %c0_i32, %c0_i32_0 : i32, i32
  }
  func.func @transform_4(%arg0: i32) -> (i32, i32) {
    %c0_i32 = arith.constant 0 : i32
    %c0_i32_0 = arith.constant 0 : i32
    %c0_i32_1 = arith.constant 0 : i32
    return %c0_i32, %c0_i32_0 : i32, i32
  }
  func.func @transform_5(%arg0: i32) -> (i32, i32) {
    %c0_i32 = arith.constant 0 : i32
    %c0_i32_0 = arith.constant 0 : i32
    %c0_i32_1 = arith.constant 0 : i32
    return %c0_i32, %c0_i32_0 : i32, i32
  }
  func.func @transform_6(%arg0: i32) -> (i32, i32) {
    %c0_i32 = arith.constant 0 : i32
    %c0_i32_0 = arith.constant 0 : i32
    %c0_i32_1 = arith.constant 0 : i32
    return %c0_i32, %c0_i32_0 : i32, i32
  }
  func.func @transform_7(%arg0: i32) -> (i32, i32) {
    %c0_i32 = arith.constant 0 : i32
    %c0_i32_0 = arith.constant 0 : i32
    return %arg0, %c0_i32 : i32, i32
  }
}

</mosaic_0001>

<llo_original>
// kernel: mlp_forward.1
$region0: #{mlp_forward.1}
  #allocation0 [shape = 'u32[]', space=smem, size = 0x4, offset = 0x4, fixed_abs, tag = 'smem constant byte address 0x4 - core index']
  #allocation1 [shape = 'u32[72,128]{1,0:T(1,128)}', space=vmem, size = 0x9000, scoped, tag = 'internal scratch']
  %s0 = inlined_call_operand.vmem [shape: f32[32,16], index: 0, kind: input, shape index: {}]
  %s1 = inlined_call_operand.vmem [shape: bf16[16,128], index: 1, kind: input, shape index: {}]
  %s2 = inlined_call_operand.vmem [shape: f32[1,128], index: 2, kind: input, shape index: {}]
  %s3 = inlined_call_operand.vmem [shape: bf16[128,128], index: 3, kind: input, shape index: {}]
  %s4 = inlined_call_operand.vmem [shape: f32[1,128], index: 4, kind: input, shape index: {}]
  %s5 = inlined_call_operand.vmem [shape: bf16[128,4], index: 5, kind: input, shape index: {}]
  %s6 = inlined_call_operand.vmem [shape: f32[1,4], index: 6, kind: input, shape index: {}]
  %s7 = inlined_call_operand.vmem [shape: f32[32,4], index: 7, kind: output, shape index: {}]
  %s8 = sld [smem:[#allocation0]]
  $region38: #{mlp_forward.1} parent=0
    _
  %s10 = ssub.s32 1, %s8
  %s11 = scalar_select 0, %s10, %s8
  // Predicated region
  $region2: #{mlp_forward.1} parent=0 // pred_check
    _
  $region3: #{mlp_forward.1} parent=0 // pred_check_branch
    %13 = sbr.rel (0) target = $region5
  $region4: #{mlp_forward.1} parent=0 // pred_region
    _
  $region5: #{mlp_forward.1} parent=0 // pred_fallthru
    _
  // Predicated region
  $region6: #{mlp_forward.1} parent=0 // pred_check
    _
  $region7: #{mlp_forward.1} parent=0 // pred_check_branch
    %15 = sbr.rel (0) target = $region9
  $region8: #{mlp_forward.1} parent=0 // pred_region
    _
  $region9: #{mlp_forward.1} parent=0 // pred_fallthru
    _
  // Predicated region
  $region10: #{mlp_forward.1} parent=0 // pred_check
    _
  $region11: #{mlp_forward.1} parent=0 // pred_check_branch
    %17 = sbr.rel (0) target = $region13
  $region12: #{mlp_forward.1} parent=0 // pred_region
    _
  $region13: #{mlp_forward.1} parent=0 // pred_fallthru
    _
  // Predicated region
  $region14: #{mlp_forward.1} parent=0 // pred_check
    _
  $region15: #{mlp_forward.1} parent=0 // pred_check_branch
    %19 = sbr.rel (0) target = $region17
  $region16: #{mlp_forward.1} parent=0 // pred_region
    _
  $region17: #{mlp_forward.1} parent=0 // pred_fallthru
    _
  // Predicated region
  $region18: #{mlp_forward.1} parent=0 // pred_check
    _
  $region19: #{mlp_forward.1} parent=0 // pred_check_branch
    %21 = sbr.rel (0) target = $region21
  $region20: #{mlp_forward.1} parent=0 // pred_region
    _
  $region21: #{mlp_forward.1} parent=0 // pred_fallthru
    _
  // Predicated region
  $region22: #{mlp_forward.1} parent=0 // pred_check
    _
  $region23: #{mlp_forward.1} parent=0 // pred_check_branch
    %23 = sbr.rel (0) target = $region25
  $region24: #{mlp_forward.1} parent=0 // pred_region
    _
  $region25: #{mlp_forward.1} parent=0 // pred_fallthru
    _
  // Predicated region
  $region26: #{mlp_forward.1} parent=0 // pred_check
    _
  $region27: #{mlp_forward.1} parent=0 // pred_check_branch
    %25 = sbr.rel (0) target = $region29
  $region28: #{mlp_forward.1} parent=0 // pred_region
    _
  $region29: #{mlp_forward.1} parent=0 // pred_fallthru
    _
  %v27 = vld [vmem:[%s1] sm:$0xf]
  %v28 = vld [vmem:[%s1 + $0x4] sm:$0xf]
  %v29 = vld [vmem:[%s3] sm:$0xf]
  %v30 = vld [vmem:[%s3 + $0x4] sm:$0xf]
  %v31 = vld [vmem:[%s3 + $0x8] sm:$0xf]
  %v32 = vld [vmem:[%s3 + $0xc] sm:$0xf]
  %v33 = vld [vmem:[%s3 + $0x10] sm:$0xf]
  %v34 = vld [vmem:[%s3 + $0x14] sm:$0xf]
  %v35 = vld [vmem:[%s3 + $0x18] sm:$0xf]
  %v36 = vld [vmem:[%s3 + $0x1c] sm:$0xf]
  %v37 = vld [vmem:[%s3 + $0x20] sm:$0xf]
  %v38 = vld [vmem:[%s3 + $0x24] sm:$0xf]
  %v39 = vld [vmem:[%s3 + $0x28] sm:$0xf]
  %v40 = vld [vmem:[%s3 + $0x2c] sm:$0xf]
  %v41 = vld [vmem:[%s3 + $0x30] sm:$0xf]
  %v42 = vld [vmem:[%s3 + $0x34] sm:$0xf]
  %v43 = vld [vmem:[%s3 + $0x38] sm:$0xf]
  %v44 = vld [vmem:[%s3 + $0x3c] sm:$0xf]
  %v45 = vld [vmem:[%s5] sm:$0xf]
  %v46 = vld [vmem:[%s5 + $0x4] sm:$0xf]
  %v47 = vld [vmem:[%s5 + $0x8] sm:$0xf]
  %v48 = vld [vmem:[%s5 + $0xc] sm:$0xf]
  %v49 = vld [vmem:[%s5 + $0x10] sm:$0xf]
  %v50 = vld [vmem:[%s5 + $0x14] sm:$0xf]
  %v51 = vld [vmem:[%s5 + $0x18] sm:$0xf]
  %v52 = vld [vmem:[%s5 + $0x1c] sm:$0xf]
  %v53 = vld [vmem:[%s5 + $0x20] sm:$0xf]
  %v54 = vld [vmem:[%s5 + $0x24] sm:$0xf]
  %v55 = vld [vmem:[%s5 + $0x28] sm:$0xf]
  %v56 = vld [vmem:[%s5 + $0x2c] sm:$0xf]
  %v57 = vld [vmem:[%s5 + $0x30] sm:$0xf]
  %v58 = vld [vmem:[%s5 + $0x34] sm:$0xf]
  %v59 = vld [vmem:[%s5 + $0x38] sm:$0xf]
  %v60 = vld [vmem:[%s5 + $0x3c] sm:$0xf]
  %v61 = vld [vmem:[%s2] sm:$0x1]
  %v62 = vld [vmem:[%s4] sm:$0x1]
  %v63 = vld [vmem:[%s6] sm:$0x1]
  %v64 = vld [vmem:[%s0] sm:$0xff]
  %v65 = vld [vmem:[%s0 + $0x8] sm:$0xff]
  %v66 = vld [vmem:[%s0 + $0x10] sm:$0xff]
  %v67 = vld [vmem:[%s0 + $0x18] sm:$0xff]
  %v68 = vpack.c.bf16 %v65, %v64
  %v69 = vpack.c.bf16 %v67, %v66
  %v71 = vperm.slane %v61, 0
  %v75 = vunpack.c.l.b16 %v27
  %v76 = vunpack.c.l.b16 %v28
  %v77 = vpack.c.b16 %v76, %v75
  %vm79 = vcmask 130048
  %v81 = vsel %vm79, %v68, 0
  %v84 = vsel %vm79, %v69, 0
  %86 = vmatpush.bf16.msra.mxu0 0
  %87 = vmatpush.bf16.msra.mxu0 0
  %88 = vmatpush.bf16.msra.mxu0 0
  %89 = vmatpush.bf16.msra.mxu0 0
  %90 = vmatpush.bf16.msra.mxu0 0
  %91 = vmatpush.bf16.msra.mxu0 0
  %92 = vmatpush.bf16.msra.mxu0 0
  %93 = vmatpush.bf16.msra.mxu0 %v77
  %94 = vmatmul.bf16.gmra.mxu0 %v81
  %v95 = vpop.f32.mrf.mxu0
  %v96 = vadd.f32 %v71, %v95
  %v97 = vpop.f32.mrf.mxu0
  %v98 = vadd.f32 %v71, %v97
  %99 = vmatmul.bf16.gmra.mxu0 %v84
  %v100 = vpop.f32.mrf.mxu0
  %v101 = vadd.f32 %v71, %v100
  %v102 = vpop.f32.mrf.mxu0
  %v103 = vadd.f32 %v71, %v102
  %104 = vdwg.mxu0
  %v105 = vmax.f32 %v96, 0.0
  %v106 = vmax.f32 %v98, 0.0
  %v107 = vmax.f32 %v101, 0.0
  %v108 = vmax.f32 %v103, 0.0
  %v109 = vpack.c.bf16 %v106, %v105
  %v110 = vpack.c.bf16 %v108, %v107
  %v112 = vperm.slane %v62, 0
  %v130 = vunpack.c.l.b16 %v29
  %v131 = vunpack.c.l.b16 %v30
  %v132 = vunpack.c.l.b16 %v31
  %v133 = vunpack.c.l.b16 %v32
  %v134 = vunpack.c.l.b16 %v33
  %v135 = vunpack.c.l.b16 %v34
  %v136 = vunpack.c.l.b16 %v35
  %v137 = vunpack.c.l.b16 %v36
  %v138 = vunpack.c.l.b16 %v37
  %v139 = vunpack.c.l.b16 %v38
  %v140 = vunpack.c.l.b16 %v39
  %v141 = vunpack.c.l.b16 %v40
  %v142 = vunpack.c.l.b16 %v41
  %v143 = vunpack.c.l.b16 %v42
  %v144 = vunpack.c.l.b16 %v43
  %v145 = vunpack.c.l.b16 %v44
  %v146 = vpack.c.b16 %v131, %v130
  %v147 = vpack.c.b16 %v133, %v132
  %v148 = vpack.c.b16 %v135, %v134
  %v149 = vpack.c.b16 %v137, %v136
  %v150 = vpack.c.b16 %v139, %v138
  %v151 = vpack.c.b16 %v141, %v140
  %v152 = vpack.c.b16 %v143, %v142
  %v153 = vpack.c.b16 %v145, %v144
  %162 = vmatpush.bf16.msra.mxu0 %v153
  %163 = vmatpush.bf16.msra.mxu0 %v152
  %164 = vmatpush.bf16.msra.mxu0 %v151
  %165 = vmatpush.bf16.msra.mxu0 %v150
  %166 = vmatpush.bf16.msra.mxu0 %v149
  %167 = vmatpush.bf16.msra.mxu0 %v148
  %168 = vmatpush.bf16.msra.mxu0 %v147
  %169 = vmatpush.bf16.msra.mxu0 %v146
  %170 = vmatmul.bf16.gmra.mxu0 %v109
  %v171 = vpop.f32.mrf.mxu0
  %v172 = vadd.f32 %v112, %v171
  %v173 = vpop.f32.mrf.mxu0
  %v174 = vadd.f32 %v112, %v173
  %175 = vmatmul.bf16.gmra.mxu0 %v110
  %v176 = vpop.f32.mrf.mxu0
  %v177 = vadd.f32 %v112, %v176
  %v178 = vpop.f32.mrf.mxu0
  %v179 = vadd.f32 %v112, %v178
  %180 = vdwg.mxu0
  %v181 = vmax.f32 %v172, 0.0
  %v182 = vmax.f32 %v174, 0.0
  %v183 = vmax.f32 %v177, 0.0
  %v184 = vmax.f32 %v179, 0.0
  %v185 = vpack.c.bf16 %v182, %v181
  %v186 = vpack.c.bf16 %v184, %v183
  %v188 = vperm.slane %v63, 0
  %v206 = vunpack.c.l.b16 %v45
  %v207 = vunpack.c.l.b16 %v46
  %v208 = vunpack.c.l.b16 %v47
  %v209 = vunpack.c.l.b16 %v48
  %v210 = vunpack.c.l.b16 %v49
  %v211 = vunpack.c.l.b16 %v50
  %v212 = vunpack.c.l.b16 %v51
  %v213 = vunpack.c.l.b16 %v52
  %v214 = vunpack.c.l.b16 %v53
  %v215 = vunpack.c.l.b16 %v54
  %v216 = vunpack.c.l.b16 %v55
  %v217 = vunpack.c.l.b16 %v56
  %v218 = vunpack.c.l.b16 %v57
  %v219 = vunpack.c.l.b16 %v58
  %v220 = vunpack.c.l.b16 %v59
  %v221 = vunpack.c.l.b16 %v60
  %v222 = vpack.c.b16 %v207, %v206
  %v223 = vpack.c.b16 %v209, %v208
  %v224 = vpack.c.b16 %v211, %v210
  %v225 = vpack.c.b16 %v213, %v212
  %v226 = vpack.c.b16 %v215, %v214
  %v227 = vpack.c.b16 %v217, %v216
  %v228 = vpack.c.b16 %v219, %v218
  %v229 = vpack.c.b16 %v221, %v220
  %238 = vmatpush.bf16.msra.mxu0 %v229
  %239 = vmatpush.bf16.msra.mxu0 %v228
  %240 = vmatpush.bf16.msra.mxu0 %v227
  %241 = vmatpush.bf16.msra.mxu0 %v226
  %242 = vmatpush.bf16.msra.mxu0 %v225
  %243 = vmatpush.bf16.msra.mxu0 %v224
  %244 = vmatpush.bf16.msra.mxu0 %v223
  %245 = vmatpush.bf16.msra.mxu0 %v222
  %246 = vmatmul.bf16.gmra.mxu0 %v185
  %v247 = vpop.f32.mrf.mxu0
  %v248 = vadd.f32 %v188, %v247
  %v249 = vpop.f32.mrf.mxu0
  %v250 = vadd.f32 %v188, %v249
  %251 = vmatmul.bf16.gmra.mxu0 %v186
  %v252 = vpop.f32.mrf.mxu0
  %v253 = vadd.f32 %v188, %v252
  %v254 = vpop.f32.mrf.mxu0
  %v255 = vadd.f32 %v188, %v254
  %256 = vdwg.mxu0
  %vm257 = vcmask 31744
  %258 = vst.msk [vmem:[%s7] sm:$0xff] %vm257, %v248
  %259 = vst.msk [vmem:[%s7 + $0x8] sm:$0xff] %vm257, %v250
  %260 = vst.msk [vmem:[%s7 + $0x10] sm:$0xff] %vm257, %v253
  %261 = vst.msk [vmem:[%s7 + $0x18] sm:$0xff] %vm257, %v255
  // Predicated region
  $region30: #{mlp_forward.1} parent=0 // pred_check
    _
  $region31: #{mlp_forward.1} parent=0 // pred_check_branch
    %263 = sbr.rel (0) target = $region33
  $region32: #{mlp_forward.1} parent=0 // pred_region
    _
  $region33: #{mlp_forward.1} parent=0 // pred_fallthru
    _
  // Predicated region
  $region34: #{mlp_forward.1} parent=0 // pred_check
    _
  $region35: #{mlp_forward.1} parent=0 // pred_check_branch
    %265 = sbr.rel (0) target = $region37
  $region36: #{mlp_forward.1} parent=0 // pred_region
    _
  $region37: #{mlp_forward.1} parent=0 // pred_fallthru
    _

</llo_original>
